<compile_context>
chip_gen: v6e
topology: v6e:2x2x1
jax: 0.10.0
libtpu: 0.0.40
codegen_flags: <defaults>
</compile_context>

<pallas_src>
import jax
import jax.numpy as jnp
from jax.experimental import pallas as pl
from jax.experimental.pallas import tpu as pltpu

HIDDEN = 768
NHEAD = 16        # number of attention "slots" used by the heads
OUT_LANES = 128   # lane-dense output width (sliced back to k in the wrapper)


def _head_kernel(x_ref, w_ref, b_ref, e_ref, r_ref, out_ref):
    # x streams in as f32; the bf16 cast is a free in-kernel VPU op.
    xb = x_ref[...].astype(jnp.bfloat16)

    # One fused bf16 MXU pass: [attention logits | task values | zero pad].
    av = jnp.dot(xb, w_ref[...], preferred_element_type=jnp.float32) + b_ref[...]

    # Softmax over the 16 attention slots (prefix slice -> lane-aligned, cheap).
    a = av[:, :NHEAD]
    a_max = jnp.max(a, axis=1, keepdims=True)
    e = jnp.exp(a - a_max)
    s = e / jnp.sum(e, axis=1, keepdims=True)
    # TODO(synk): nn.Dropout(0.2) on the scores is identity in eval mode.

    # out[n, c] = sum_j s[n, j] * av[n, 16 + j*k + c]
    # E is a 0/1 (16, W) bf16 matrix whose first 16 columns are zero; R is a
    # 0/1 (W, 128) bf16 matrix whose first 16 rows are zero.  No misaligned
    # slice of av is ever taken and both epilogue dots are bf16 MXU matmuls.
    s_exp = jnp.dot(s.astype(jnp.bfloat16), e_ref[...],
                    preferred_element_type=jnp.float32)
    sv = (s_exp * av).astype(jnp.bfloat16)
    out_ref[...] = jnp.dot(sv, r_ref[...], preferred_element_type=jnp.float32)


def _choose_rows(n, tn):
    """Pick (row_tile, padded_rows).  Tiny inputs -> one full block; large
    inputs -> at least two row blocks so the 'parallel' axis can shard across
    the two TensorCores on v7x (harmless on v5e/v6e)."""
    n16 = ((n + 15) // 16) * 16
    if n16 <= 256:
        return n16, n16
    half = (((n16 + 1) // 2 + 15) // 16) * 16
    tn_eff = min(tn, half)
    n_pad = ((n16 + tn_eff - 1) // tn_eff) * tn_eff
    return tn_eff, n_pad


def head_forward(x, w_fused, b_fused, emat, rmat, k, *, tn=512):
    """x: (N, 768) f32; w_fused: (768, W) bf16; b_fused: (1, W) f32;
    emat: (16, W) bf16; rmat: (W, 128) bf16.  Returns (N, k) f32."""
    n = x.shape[0]
    width = w_fused.shape[1]

    tn_eff, n_pad = _choose_rows(n, tn)
    if n_pad != n:
        x = jnp.pad(x, ((0, n_pad - n), (0, 0)))
    grid = (n_pad // tn_eff,)

    flops = 2 * n_pad * width * (HIDDEN + NHEAD + OUT_LANES)
    bytes_accessed = (x.size * 4 + w_fused.size * 2 + b_fused.size * 4
                      + emat.size * 2 + rmat.size * 2
                      + n_pad * OUT_LANES * 4)

    out = pl.pallas_call(
        _head_kernel,
        out_shape=jax.ShapeDtypeStruct((n_pad, OUT_LANES), jnp.float32),
        grid=grid,
        in_specs=[
            pl.BlockSpec((tn_eff, HIDDEN), lambda i: (i, 0)),    # x: streamed
            pl.BlockSpec((HIDDEN, width), lambda i: (0, 0)),     # W: resident
            pl.BlockSpec((1, width), lambda i: (0, 0)),          # bias
            pl.BlockSpec((NHEAD, width), lambda i: (0, 0)),      # E
            pl.BlockSpec((width, OUT_LANES), lambda i: (0, 0)),  # R
        ],
        out_specs=pl.BlockSpec((tn_eff, OUT_LANES), lambda i: (i, 0)),
        compiler_params=pltpu.CompilerParams(
            dimension_semantics=("parallel",)),
        cost_estimate=pl.CostEstimate(
            flops=flops,
            transcendentals=n_pad * NHEAD,
            bytes_accessed=bytes_accessed),
    )(x, w_fused, b_fused, emat, rmat)
    return out[:n, :k]


def init_params(key):
    ks = jax.random.split(key, 9)
    scale = 0.02
    return {
        "embed": scale * jax.random.normal(ks[0], (100, HIDDEN), jnp.float32),
        "atten_w": scale * jax.random.normal(ks[1], (HIDDEN, NHEAD), jnp.float32),
        "atten_b": scale * jax.random.normal(ks[2], (1, NHEAD), jnp.float32),
        "ocnli_w": scale * jax.random.normal(ks[3], (HIDDEN, NHEAD * 3), jnp.float32),
        "ocnli_b": scale * jax.random.normal(ks[4], (1, NHEAD * 3), jnp.float32),
        "ocemotion_w": scale * jax.random.normal(ks[5], (HIDDEN, NHEAD * 7), jnp.float32),
        "ocemotion_b": scale * jax.random.normal(ks[6], (1, NHEAD * 7), jnp.float32),
        "tnews_w": scale * jax.random.normal(ks[7], (HIDDEN, NHEAD * 15), jnp.float32),
        "tnews_b": scale * jax.random.normal(ks[8], (1, NHEAD * 15), jnp.float32),
    }


def _fuse(params, name, k):
    """Fuse attention + task weights into one (768, W) bf16 matmul (W = 16+16k
    rounded up to a 128 multiple), and build the 0/1 bf16 expand (E) / reduce
    (R) matrices padded over the full fused width and a lane-dense output."""
    width = NHEAD * (1 + k)
    width_pad = max(128, ((width + 127) // 128) * 128)

    w = jnp.concatenate([params["atten_w"], params[name + "_w"]], axis=1)
    b = jnp.concatenate([params["atten_b"], params[name + "_b"]], axis=1)
    if width_pad != width:
        w = jnp.pad(w, ((0, 0), (0, width_pad - width)))
        b = jnp.pad(b, ((0, 0), (0, width_pad - width)))

    # E[j, 16 + j*k + c] = 1 (first 16 and padded columns are zero).
    e_core = jnp.repeat(jnp.eye(NHEAD, dtype=jnp.float32), k, axis=1)   # (16, 16k)
    emat = jnp.pad(e_core, ((0, 0), (NHEAD, width_pad - width)))
    # R[16 + j*k + c, c] = 1 (first 16 / padded rows and cols >= k are zero).
    r_core = jnp.tile(jnp.eye(k, dtype=jnp.float32), (NHEAD, 1))        # (16k, k)
    rmat = jnp.pad(r_core, ((NHEAD, width_pad - width), (0, OUT_LANES - k)))

    return (w.astype(jnp.bfloat16), b.astype(jnp.float32),
            emat.astype(jnp.bfloat16), rmat.astype(jnp.bfloat16))


def net_forward(params, input_ids, ocnli_ids, ocemotion_ids, tnews_ids):
    # TODO(synk): BERT encoder surrogate — deterministic [CLS] embedding lookup.
    cls_emb = params["embed"][input_ids[:, 0], :]        # (B, 768) f32

    def run(ids, name, k):
        if ids.shape[0] == 0:
            return None
        x = jnp.take(cls_emb, ids, axis=0)               # (N, 768) f32
        w, b, emat, rmat = _fuse(params, name, k)
        return head_forward(x, w, b, emat, rmat, k)

    return (run(ocnli_ids, "ocnli", 3),
            run(ocemotion_ids, "ocemotion", 7),
            run(tnews_ids, "tnews", 15))


def _reference_head(x, wa, ba, wt, bt, k):
    a = x @ wa + ba
    s = jax.nn.softmax(a, axis=1)
    v = (x @ wt + bt).reshape(-1, NHEAD, k)
    return jnp.einsum("nj,njc->nc", s, v)


if __name__ == "__main__":
    key = jax.random.PRNGKey(0)
    kp, kd = jax.random.split(key)
    params = init_params(kp)

    B, S = 8, 8
    input_ids = jax.random.randint(kd, (B, S), 0, 100, dtype=jnp.int32)
    ocnli_ids = jnp.array([0, 1, 2], dtype=jnp.int32)
    ocemotion_ids = jnp.array([3, 4], dtype=jnp.int32)
    tnews_ids = jnp.array([5, 6, 7], dtype=jnp.int32)

    outs = net_forward(params, input_ids, ocnli_ids, ocemotion_ids, tnews_ids)
    outs = jax.block_until_ready(outs)

    # sanity check against a pure-JAX f32 reference (bf16 matmuls -> loose tol)
    cls_emb = params["embed"][input_ids[:, 0], :]
    for ids, w, b, k, got in [
        (ocnli_ids, params["ocnli_w"], params["ocnli_b"], 3, outs[0]),
        (ocemotion_ids, params["ocemotion_w"], params["ocemotion_b"], 7, outs[1]),
        (tnews_ids, params["tnews_w"], params["tnews_b"], 15, outs[2]),
    ]:
        x = jnp.take(cls_emb, ids, axis=0)
        ref = _reference_head(x, params["atten_w"], params["atten_b"], w, b, k)
        assert got.shape == (ids.shape[0], k)
        assert jnp.allclose(got, ref, atol=1e-2, rtol=1e-2)

    # also exercise the multi-block row-pipelined path (grid >= 2)
    n_big = 320
    ids_big = jnp.arange(n_big, dtype=jnp.int32) % B
    x_big = jnp.take(cls_emb, ids_big, axis=0)
    wf, bf, emat, rmat = _fuse(params, "tnews", 15)
    got_big = jax.block_until_ready(head_forward(x_big, wf, bf, emat, rmat, 15))
    ref_big = _reference_head(x_big, params["atten_w"], params["atten_b"],
                              params["tnews_w"], params["tnews_b"], 15)
    assert got_big.shape == (n_big, 15)
    assert jnp.allclose(got_big, ref_big, atol=1e-2, rtol=1e-2)

    print("KERNEL_OK")
</pallas_src>

<mosaic_0001>
module attributes {stable_mosaic.version = 11 : i64} {
  func.func @_head_kernel(%arg0: i32, %arg1: memref<16x768xf32, #tpu.memory_space<vmem>>, %arg2: memref<768x128xbf16, #tpu.memory_space<vmem>>, %arg3: memref<1x128xf32, #tpu.memory_space<vmem>>, %arg4: memref<16x128xbf16, #tpu.memory_space<vmem>>, %arg5: memref<128x128xbf16, #tpu.memory_space<vmem>>, %arg6: memref<16x128xf32, #tpu.memory_space<vmem>>) attributes {dimension_semantics = [#tpu.dimension_semantics<parallel>], iteration_bounds = array<i64: 1>, scalar_prefetch = 0 : i64, scratch_operands = 0 : i64, tpu.core_type = #tpu.core_type<tc>, window_params = [{transform_indices = @transform_0, window_bounds = array<i64: 16, 768>}, {pipeline_mode = #tpu.pipeline_mode<synchronous>, transform_indices = @transform_1, window_bounds = array<i64: 768, 128>}, {pipeline_mode = #tpu.pipeline_mode<synchronous>, transform_indices = @transform_2, window_bounds = array<i64: 1, 128>}, {pipeline_mode = #tpu.pipeline_mode<synchronous>, transform_indices = @transform_3, window_bounds = array<i64: 16, 128>}, {pipeline_mode = #tpu.pipeline_mode<synchronous>, transform_indices = @transform_4, window_bounds = array<i64: 128, 128>}, {transform_indices = @transform_5, window_bounds = array<i64: 16, 128>}]} {
    %c0 = arith.constant 0 : index
    %c0_0 = arith.constant 0 : index
    %0 = vector.load %arg1[%c0, %c0_0] : memref<16x768xf32, #tpu.memory_space<vmem>>, vector<16x768xf32>
    %1 = arith.truncf %0 : vector<16x768xf32> to vector<16x768xbf16>
    %c0_1 = arith.constant 0 : index
    %c0_2 = arith.constant 0 : index
    %2 = vector.load %arg2[%c0_1, %c0_2] : memref<768x128xbf16, #tpu.memory_space<vmem>>, vector<768x128xbf16>
    %cst = arith.constant dense<0.000000e+00> : vector<16x128xf32>
    %3 = tpu.matmul %1, %2, %cst {dimension_numbers = #tpu.dot_dimension_numbers<[1], [0], [0], [1], [0, 0, 1, 1], [], []>} : vector<16x768xbf16>, vector<768x128xbf16>, vector<16x128xf32> -> vector<16x128xf32>
    %c0_3 = arith.constant 0 : index
    %c0_4 = arith.constant 0 : index
    %4 = vector.load %arg3[%c0_3, %c0_4] : memref<1x128xf32, #tpu.memory_space<vmem>>, vector<1x128xf32>
    %5 = vector.broadcast %4 : vector<1x128xf32> to vector<16x128xf32>
    %6 = arith.addf %3, %5 : vector<16x128xf32>
    %7 = vector.extract_strided_slice %6 {offsets = [0, 0], sizes = [16, 16], strides = [1, 1]} : vector<16x128xf32> to vector<16x16xf32>
    %cst_5 = arith.constant dense<0xFF800000> : vector<16xf32>
    %8 = vector.multi_reduction <maximumf>, %7, %cst_5 [1] : vector<16x16xf32> to vector<16xf32>
    %9 = vector.shape_cast %8 : vector<16xf32> to vector<16x1xf32>
    %10 = vector.broadcast %9 : vector<16x1xf32> to vector<16x16xf32>
    %11 = arith.subf %7, %10 : vector<16x16xf32>
    %12 = math.exp %11 : vector<16x16xf32>
    %cst_6 = arith.constant dense<0.000000e+00> : vector<16xf32>
    %13 = vector.multi_reduction <add>, %12, %cst_6 [1] : vector<16x16xf32> to vector<16xf32>
    %14 = vector.shape_cast %13 : vector<16xf32> to vector<16x1xf32>
    %15 = vector.broadcast %14 : vector<16x1xf32> to vector<16x16xf32>
    %16 = arith.divf %12, %15 : vector<16x16xf32>
    %17 = arith.truncf %16 : vector<16x16xf32> to vector<16x16xbf16>
    %c0_7 = arith.constant 0 : index
    %c0_8 = arith.constant 0 : index
    %18 = vector.load %arg4[%c0_7, %c0_8] : memref<16x128xbf16, #tpu.memory_space<vmem>>, vector<16x128xbf16>
    %cst_9 = arith.constant dense<0.000000e+00> : vector<16x128xf32>
    %19 = tpu.matmul %17, %18, %cst_9 {dimension_numbers = #tpu.dot_dimension_numbers<[1], [0], [0], [1], [0, 0, 1, 1], [], []>} : vector<16x16xbf16>, vector<16x128xbf16>, vector<16x128xf32> -> vector<16x128xf32>
    %20 = arith.mulf %19, %6 : vector<16x128xf32>
    %21 = arith.truncf %20 : vector<16x128xf32> to vector<16x128xbf16>
    %c0_10 = arith.constant 0 : index
    %c0_11 = arith.constant 0 : index
    %22 = vector.load %arg5[%c0_10, %c0_11] : memref<128x128xbf16, #tpu.memory_space<vmem>>, vector<128x128xbf16>
    %cst_12 = arith.constant dense<0.000000e+00> : vector<16x128xf32>
    %23 = tpu.matmul %21, %22, %cst_12 {dimension_numbers = #tpu.dot_dimension_numbers<[1], [0], [0], [1], [0, 0, 1, 1], [], []>} : vector<16x128xbf16>, vector<128x128xbf16>, vector<16x128xf32> -> vector<16x128xf32>
    %c0_13 = arith.constant 0 : index
    %c0_14 = arith.constant 0 : index
    %24 = vector.load %arg6[%c0_13, %c0_14] : memref<16x128xf32, #tpu.memory_space<vmem>>, vector<16x128xf32>
    tpu.vector_store %arg6[%c0_13, %c0_14], %23 {strides = array<i32>} : memref<16x128xf32, #tpu.memory_space<vmem>>, vector<16x128xf32>,
    return
  }
  func.func @transform_0(%arg0: i32) -> (i32, i32) {
    %c0_i32 = arith.constant 0 : i32
    %c0_i32_0 = arith.constant 0 : i32
    return %arg0, %c0_i32 : i32, i32
  }
  func.func @transform_1(%arg0: i32) -> (i32, i32) {
    %c0_i32 = arith.constant 0 : i32
    %c0_i32_0 = arith.constant 0 : i32
    %c0_i32_1 = arith.constant 0 : i32
    return %c0_i32, %c0_i32_0 : i32, i32
  }
  func.func @transform_2(%arg0: i32) -> (i32, i32) {
    %c0_i32 = arith.constant 0 : i32
    %c0_i32_0 = arith.constant 0 : i32
    %c0_i32_1 = arith.constant 0 : i32
    return %c0_i32, %c0_i32_0 : i32, i32
  }
  func.func @transform_3(%arg0: i32) -> (i32, i32) {
    %c0_i32 = arith.constant 0 : i32
    %c0_i32_0 = arith.constant 0 : i32
    %c0_i32_1 = arith.constant 0 : i32
    return %c0_i32, %c0_i32_0 : i32, i32
  }
  func.func @transform_4(%arg0: i32) -> (i32, i32) {
    %c0_i32 = arith.constant 0 : i32
    %c0_i32_0 = arith.constant 0 : i32
    %c0_i32_1 = arith.constant 0 : i32
    return %c0_i32, %c0_i32_0 : i32, i32
  }
  func.func @transform_5(%arg0: i32) -> (i32, i32) {
    %c0_i32 = arith.constant 0 : i32
    %c0_i32_0 = arith.constant 0 : i32
    return %arg0, %c0_i32 : i32, i32
  }
}

</mosaic_0001>

<llo_original>
// kernel: tpu_custom_call.1
$region0: #{tpu_custom_call.1}
  #allocation0 [shape = 'u32[]', space=smem, size = 0x4, offset = 0x4, fixed_abs, tag = 'smem constant byte address 0x4 - core index']
  #allocation1 [shape = 'u32[144,128]{1,0:T(1,128)}', space=vmem, size = 0x12000, scoped, tag = 'internal scratch']
  %s0 = inlined_call_operand.hbm [shape: f32[16,768], index: 0, kind: input, shape index: {}]
  %s1 = inlined_call_operand.hbm [shape: bf16[768,128], index: 1, kind: input, shape index: {}]
  %s2 = inlined_call_operand.vmem [shape: f32[1,128], index: 2, kind: input, shape index: {}]
  %s3 = inlined_call_operand.hbm [shape: bf16[16,128], index: 3, kind: input, shape index: {}]
  %s4 = inlined_call_operand.hbm [shape: bf16[128,128], index: 4, kind: input, shape index: {}]
  %s5 = inlined_call_operand.hbm [shape: f32[16,128], index: 5, kind: output, shape index: {}]
  %s6 = sld [smem:[#allocation0]]
  $region46: #{tpu_custom_call.1} parent=0
    _
  %s8 = ssub.s32 1, %s6
  %s9 = scalar_select 0, %s8, %s6
  $region1: #{tpu_custom_call.1} parent=0
    #allocation2 [shape = 'u8[49152]{0}', space=vmem, size = 0xc000, scoped, tag = 'input window, operand 0, single buffered']
    #allocation3 [shape = 's32[1]{0}', space=sflag, size = 0x4, scoped, tag = 'scoped memory for tpu_custom_call.1']
    #allocation4 [shape = 's32[1]{0}', space=sflag, size = 0x4, scoped, tag = 'scoped memory for tpu_custom_call.1']
    #allocation5 [shape = 'u8[196608]{0}', space=vmem, size = 0x30000, scoped, tag = 'input window, operand 1, single buffered']
    #allocation6 [shape = 's32[1]{0}', space=sflag, size = 0x4, scoped, tag = 'scoped memory for tpu_custom_call.1']
    #allocation7 [shape = 'u8[4096]{0}', space=vmem, size = 0x1000, scoped, tag = 'input window, operand 3, single buffered']
    #allocation8 [shape = 'u8[32768]{0}', space=vmem, size = 0x8000, scoped, tag = 'input window, operand 4, single buffered']
    #allocation9 [shape = 's32[1]{0}', space=sflag, size = 0x4, scoped, tag = 'scoped memory for tpu_custom_call.1']
    #allocation10 [shape = 'u8[8192]{0}', space=vmem, size = 0x2000, scoped, tag = 'output window, operand 0, single buffered']
    %10 = vsyncpa [#allocation3], 0
    %11 = vsyncpa [#allocation6], 0
    %12 = vsyncpa [#allocation9], 0
    %13 = vsyncpa [#allocation4], 0
    // Predicated region
    $region2: #{tpu_custom_call.1} parent=1 // pred_check
      _
    $region3: #{tpu_custom_call.1} parent=1 // pred_check_branch
      %15 = sbr.rel (0) target = $region5
    $region4: #{tpu_custom_call.1} parent=1 // pred_region
      %s17 = ssub.s32 1536, 1536
      %18 = vsyncadd [#allocation3], %s17
      %s19 = sshll.u32 [#allocation2], 4
      %s20 = int_to_ptr.vmem [resolvable:$true] %s19
      %25 = dma.hbm_to_vmem [thread:$0]  %s0, 1536, %s20, [#allocation3], 768, 768, 48
    $region5: #{tpu_custom_call.1} parent=1 // pred_fallthru
      _
    // Predicated region
    $region6: #{tpu_custom_call.1} parent=1 // pred_check
      _
    $region7: #{tpu_custom_call.1} parent=1 // pred_check_branch
      %27 = sbr.rel (0) target = $region9
    $region8: #{tpu_custom_call.1} parent=1 // pred_region
      %s29 = ssub.s32 6144, 6144
      %30 = vsyncadd [#allocation6], %s29
      %s31 = sshll.u32 [#allocation5], 4
      %s32 = int_to_ptr.vmem [resolvable:$true] %s31
      %37 = dma.hbm_to_vmem [thread:$0]  %s1, 6144, %s32, [#allocation6], 64, 64, 4
    $region9: #{tpu_custom_call.1} parent=1 // pred_fallthru
      _
    // Predicated region
    $region10: #{tpu_custom_call.1} parent=1 // pred_check
      _
    $region11: #{tpu_custom_call.1} parent=1 // pred_check_branch
      %39 = sbr.rel (0) target = $region13
    $region12: #{tpu_custom_call.1} parent=1 // pred_region
      _
    $region13: #{tpu_custom_call.1} parent=1 // pred_fallthru
      _
    // Predicated region
    $region14: #{tpu_custom_call.1} parent=1 // pred_check
      _
    $region15: #{tpu_custom_call.1} parent=1 // pred_check_branch
      %41 = sbr.rel (0) target = $region17
    $region16: #{tpu_custom_call.1} parent=1 // pred_region
      %s43 = ssub.s32 128, 128
      %44 = vsyncadd [#allocation6], %s43
      %s45 = sshll.u32 [#allocation7], 4
      %s46 = int_to_ptr.vmem [resolvable:$true] %s45
      %51 = dma.hbm_to_vmem [thread:$0]  %s3, 128, %s46, [#allocation6], 64, 64, 4
    $region17: #{tpu_custom_call.1} parent=1 // pred_fallthru
      _
    // Predicated region
    $region18: #{tpu_custom_call.1} parent=1 // pred_check
      _
    $region19: #{tpu_custom_call.1} parent=1 // pred_check_branch
      %53 = sbr.rel (0) target = $region21
    $region20: #{tpu_custom_call.1} parent=1 // pred_region
      %s55 = ssub.s32 1024, 1024
      %56 = vsyncadd [#allocation9], %s55
      %s57 = sshll.u32 [#allocation8], 4
      %s58 = int_to_ptr.vmem [resolvable:$true] %s57
      %63 = dma.hbm_to_vmem [thread:$0]  %s4, 1024, %s58, [#allocation9], 64, 64, 4
    $region21: #{tpu_custom_call.1} parent=1 // pred_fallthru
      _
    // Predicated region
    $region22: #{tpu_custom_call.1} parent=1 // pred_check
      _
    $region23: #{tpu_custom_call.1} parent=1 // pred_check_branch
      %65 = sbr.rel (0) target = $region25
    $region24: #{tpu_custom_call.1} parent=1 // pred_region
      %66 = dma.done [#allocation3], 1536
    $region25: #{tpu_custom_call.1} parent=1 // pred_fallthru
      _
    // Predicated region
    $region26: #{tpu_custom_call.1} parent=1 // pred_check
      _
    $region27: #{tpu_custom_call.1} parent=1 // pred_check_branch
      %68 = sbr.rel (0) target = $region29
    $region28: #{tpu_custom_call.1} parent=1 // pred_region
      %69 = dma.done [#allocation6], 6144
    $region29: #{tpu_custom_call.1} parent=1 // pred_fallthru
      _
    // Predicated region
    $region30: #{tpu_custom_call.1} parent=1 // pred_check
      _
    $region31: #{tpu_custom_call.1} parent=1 // pred_check_branch
      %71 = sbr.rel (0) target = $region33
    $region32: #{tpu_custom_call.1} parent=1 // pred_region
      %72 = dma.done [#allocation6], 128
    $region33: #{tpu_custom_call.1} parent=1 // pred_fallthru
      _
    // Predicated region
    $region34: #{tpu_custom_call.1} parent=1 // pred_check
      _
    $region35: #{tpu_custom_call.1} parent=1 // pred_check_branch
      %74 = sbr.rel (0) target = $region37
    $region36: #{tpu_custom_call.1} parent=1 // pred_region
      %75 = dma.done [#allocation9], 1024
    $region37: #{tpu_custom_call.1} parent=1 // pred_fallthru
      _
    %v77 = vld [vmem:[#allocation2] sm:$0xff]
    %v78 = vld [vmem:[#allocation2 + $0x8] sm:$0xff]
    %v79 = vld [vmem:[#allocation2 + $0x10] sm:$0xff]
    %v80 = vld [vmem:[#allocation2 + $0x18] sm:$0xff]
    %v81 = vld [vmem:[#allocation2 + $0x20] sm:$0xff]
    %v82 = vld [vmem:[#allocation2 + $0x28] sm:$0xff]
    %v83 = vld [vmem:[#allocation2 + $0x30] sm:$0xff]
    %v84 = vld [vmem:[#allocation2 + $0x38] sm:$0xff]
    %v85 = vld [vmem:[#allocation2 + $0x40] sm:$0xff]
    %v86 = vld [vmem:[#allocation2 + $0x48] sm:$0xff]
    %v87 = vld [vmem:[#allocation2 + $0x50] sm:$0xff]
    %v88 = vld [vmem:[#allocation2 + $0x58] sm:$0xff]
    %v89 = vpack.c.bf16 %v83, %v77
    %v90 = vpack.c.bf16 %v84, %v78
    %v91 = vpack.c.bf16 %v85, %v79
    %v92 = vpack.c.bf16 %v86, %v80
    %v93 = vpack.c.bf16 %v87, %v81
    %v94 = vpack.c.bf16 %v88, %v82
    %v95 = vld [vmem:[#allocation5] sm:$0xf]
    %v96 = vld [vmem:[#allocation5 + $0x4] sm:$0xf]
    %v97 = vld [vmem:[#allocation5 + $0x8] sm:$0xf]
    %v98 = vld [vmem:[#allocation5 + $0xc] sm:$0xf]
    %v99 = vld [vmem:[#allocation5 + $0x10] sm:$0xf]
    %v100 = vld [vmem:[#allocation5 + $0x14] sm:$0xf]
    %v101 = vld [vmem:[#allocation5 + $0x18] sm:$0xf]
    %v102 = vld [vmem:[#allocation5 + $0x1c] sm:$0xf]
    %v103 = vld [vmem:[#allocation5 + $0x20] sm:$0xf]
    %v104 = vld [vmem:[#allocation5 + $0x24] sm:$0xf]
    %v105 = vld [vmem:[#allocation5 + $0x28] sm:$0xf]
    %v106 = vld [vmem:[#allocation5 + $0x2c] sm:$0xf]
    %v107 = vld [vmem:[#allocation5 + $0x30] sm:$0xf]
    %v108 = vld [vmem:[#allocation5 + $0x34] sm:$0xf]
    %v109 = vld [vmem:[#allocation5 + $0x38] sm:$0xf]
    %v110 = vld [vmem:[#allocation5 + $0x3c] sm:$0xf]
    %v111 = vld [vmem:[#allocation5 + $0x40] sm:$0xf]
    %v112 = vld [vmem:[#allocation5 + $0x44] sm:$0xf]
    %v113 = vld [vmem:[#allocation5 + $0x48] sm:$0xf]
    %v114 = vld [vmem:[#allocation5 + $0x4c] sm:$0xf]
    %v115 = vld [vmem:[#allocation5 + $0x50] sm:$0xf]
    %v116 = vld [vmem:[#allocation5 + $0x54] sm:$0xf]
    %v117 = vld [vmem:[#allocation5 + $0x58] sm:$0xf]
    %v118 = vld [vmem:[#allocation5 + $0x5c] sm:$0xf]
    %v119 = vld [vmem:[#allocation5 + $0x60] sm:$0xf]
    %v120 = vld [vmem:[#allocation5 + $0x64] sm:$0xf]
    %v121 = vld [vmem:[#allocation5 + $0x68] sm:$0xf]
    %v122 = vld [vmem:[#allocation5 + $0x6c] sm:$0xf]
    %v123 = vld [vmem:[#allocation5 + $0x70] sm:$0xf]
    %v124 = vld [vmem:[#allocation5 + $0x74] sm:$0xf]
    %v125 = vld [vmem:[#allocation5 + $0x78] sm:$0xf]
    %v126 = vld [vmem:[#allocation5 + $0x7c] sm:$0xf]
    %v127 = vld [vmem:[#allocation5 + $0x80] sm:$0xf]
    %v128 = vld [vmem:[#allocation5 + $0x84] sm:$0xf]
    %v129 = vld [vmem:[#allocation5 + $0x88] sm:$0xf]
    %v130 = vld [vmem:[#allocation5 + $0x8c] sm:$0xf]
    %v131 = vld [vmem:[#allocation5 + $0x90] sm:$0xf]
    %v132 = vld [vmem:[#allocation5 + $0x94] sm:$0xf]
    %v133 = vld [vmem:[#allocation5 + $0x98] sm:$0xf]
    %v134 = vld [vmem:[#allocation5 + $0x9c] sm:$0xf]
    %v135 = vld [vmem:[#allocation5 + $0xa0] sm:$0xf]
    %v136 = vld [vmem:[#allocation5 + $0xa4] sm:$0xf]
    %v137 = vld [vmem:[#allocation5 + $0xa8] sm:$0xf]
    %v138 = vld [vmem:[#allocation5 + $0xac] sm:$0xf]
    %v139 = vld [vmem:[#allocation5 + $0xb0] sm:$0xf]
    %v140 = vld [vmem:[#allocation5 + $0xb4] sm:$0xf]
    %v141 = vld [vmem:[#allocation5 + $0xb8] sm:$0xf]
    %v142 = vld [vmem:[#allocation5 + $0xbc] sm:$0xf]
    %v143 = vld [vmem:[#allocation5 + $0xc0] sm:$0xf]
    %v144 = vld [vmem:[#allocation5 + $0xc4] sm:$0xf]
    %v145 = vld [vmem:[#allocation5 + $0xc8] sm:$0xf]
    %v146 = vld [vmem:[#allocation5 + $0xcc] sm:$0xf]
    %v147 = vld [vmem:[#allocation5 + $0xd0] sm:$0xf]
    %v148 = vld [vmem:[#allocation5 + $0xd4] sm:$0xf]
    %v149 = vld [vmem:[#allocation5 + $0xd8] sm:$0xf]
    %v150 = vld [vmem:[#allocation5 + $0xdc] sm:$0xf]
    %v151 = vld [vmem:[#allocation5 + $0xe0] sm:$0xf]
    %v152 = vld [vmem:[#allocation5 + $0xe4] sm:$0xf]
    %v153 = vld [vmem:[#allocation5 + $0xe8] sm:$0xf]
    %v154 = vld [vmem:[#allocation5 + $0xec] sm:$0xf]
    %v155 = vld [vmem:[#allocation5 + $0xf0] sm:$0xf]
    %v156 = vld [vmem:[#allocation5 + $0xf4] sm:$0xf]
    %v157 = vld [vmem:[#allocation5 + $0xf8] sm:$0xf]
    %v158 = vld [vmem:[#allocation5 + $0xfc] sm:$0xf]
    %v159 = vld [vmem:[#allocation5 + $0x100] sm:$0xf]
    %v160 = vld [vmem:[#allocation5 + $0x104] sm:$0xf]
    %v161 = vld [vmem:[#allocation5 + $0x108] sm:$0xf]
    %v162 = vld [vmem:[#allocation5 + $0x10c] sm:$0xf]
    %v163 = vld [vmem:[#allocation5 + $0x110] sm:$0xf]
    %v164 = vld [vmem:[#allocation5 + $0x114] sm:$0xf]
    %v165 = vld [vmem:[#allocation5 + $0x118] sm:$0xf]
    %v166 = vld [vmem:[#allocation5 + $0x11c] sm:$0xf]
    %v167 = vld [vmem:[#allocation5 + $0x120] sm:$0xf]
    %v168 = vld [vmem:[#allocation5 + $0x124] sm:$0xf]
    %v169 = vld [vmem:[#allocation5 + $0x128] sm:$0xf]
    %v170 = vld [vmem:[#allocation5 + $0x12c] sm:$0xf]
    %v171 = vld [vmem:[#allocation5 + $0x130] sm:$0xf]
    %v172 = vld [vmem:[#allocation5 + $0x134] sm:$0xf]
    %v173 = vld [vmem:[#allocation5 + $0x138] sm:$0xf]
    %v174 = vld [vmem:[#allocation5 + $0x13c] sm:$0xf]
    %v175 = vld [vmem:[#allocation5 + $0x140] sm:$0xf]
    %v176 = vld [vmem:[#allocation5 + $0x144] sm:$0xf]
    %v177 = vld [vmem:[#allocation5 + $0x148] sm:$0xf]
    %v178 = vld [vmem:[#allocation5 + $0x14c] sm:$0xf]
    %v179 = vld [vmem:[#allocation5 + $0x150] sm:$0xf]
    %v180 = vld [vmem:[#allocation5 + $0x154] sm:$0xf]
    %v181 = vld [vmem:[#allocation5 + $0x158] sm:$0xf]
    %v182 = vld [vmem:[#allocation5 + $0x15c] sm:$0xf]
    %v183 = vld [vmem:[#allocation5 + $0x160] sm:$0xf]
    %v184 = vld [vmem:[#allocation5 + $0x164] sm:$0xf]
    %v185 = vld [vmem:[#allocation5 + $0x168] sm:$0xf]
    %v186 = vld [vmem:[#allocation5 + $0x16c] sm:$0xf]
    %v187 = vld [vmem:[#allocation5 + $0x170] sm:$0xf]
    %v188 = vld [vmem:[#allocation5 + $0x174] sm:$0xf]
    %v189 = vld [vmem:[#allocation5 + $0x178] sm:$0xf]
    %v190 = vld [vmem:[#allocation5 + $0x17c] sm:$0xf]
    %v191 = vld [vmem:[%s2] sm:$0x1]
    %v193 = vlaneseq
    %v194 = vshrl.u32 %v193, 7
    %v195 = vsub.s32 0, %v194
    %v196 = vrot.slane %v191, %v195
    %v294 = vunpack.c.l.b16 %v95
    %v295 = vunpack.c.l.b16 %v96
    %v296 = vunpack.c.l.b16 %v97
    %v297 = vunpack.c.l.b16 %v98
    %v298 = vunpack.c.l.b16 %v99
    %v299 = vunpack.c.l.b16 %v100
    %v300 = vunpack.c.l.b16 %v101
    %v301 = vunpack.c.l.b16 %v102
    %v302 = vunpack.c.l.b16 %v103
    %v303 = vunpack.c.l.b16 %v104
    %v304 = vunpack.c.l.b16 %v105
    %v305 = vunpack.c.l.b16 %v106
    %v306 = vunpack.c.l.b16 %v107
    %v307 = vunpack.c.l.b16 %v108
    %v308 = vunpack.c.l.b16 %v109
    %v309 = vunpack.c.l.b16 %v110
    %v310 = vunpack.c.l.b16 %v111
    %v311 = vunpack.c.l.b16 %v112
    %v312 = vunpack.c.l.b16 %v113
    %v313 = vunpack.c.l.b16 %v114
    %v314 = vunpack.c.l.b16 %v115
    %v315 = vunpack.c.l.b16 %v116
    %v316 = vunpack.c.l.b16 %v117
    %v317 = vunpack.c.l.b16 %v118
    %v318 = vunpack.c.l.b16 %v119
    %v319 = vunpack.c.l.b16 %v120
    %v320 = vunpack.c.l.b16 %v121
    %v321 = vunpack.c.l.b16 %v122
    %v322 = vunpack.c.l.b16 %v123
    %v323 = vunpack.c.l.b16 %v124
    %v324 = vunpack.c.l.b16 %v125
    %v325 = vunpack.c.l.b16 %v126
    %v326 = vunpack.c.l.b16 %v127
    %v327 = vunpack.c.l.b16 %v128
    %v328 = vunpack.c.l.b16 %v129
    %v329 = vunpack.c.l.b16 %v130
    %v330 = vunpack.c.l.b16 %v131
    %v331 = vunpack.c.l.b16 %v132
    %v332 = vunpack.c.l.b16 %v133
    %v333 = vunpack.c.l.b16 %v134
    %v334 = vunpack.c.l.b16 %v135
    %v335 = vunpack.c.l.b16 %v136
    %v336 = vunpack.c.l.b16 %v137
    %v337 = vunpack.c.l.b16 %v138
    %v338 = vunpack.c.l.b16 %v139
    %v339 = vunpack.c.l.b16 %v140
    %v340 = vunpack.c.l.b16 %v141
    %v341 = vunpack.c.l.b16 %v142
    %v342 = vunpack.c.l.b16 %v143
    %v343 = vunpack.c.l.b16 %v144
    %v344 = vunpack.c.l.b16 %v145
    %v345 = vunpack.c.l.b16 %v146
    %v346 = vunpack.c.l.b16 %v147
    %v347 = vunpack.c.l.b16 %v148
    %v348 = vunpack.c.l.b16 %v149
    %v349 = vunpack.c.l.b16 %v150
    %v350 = vunpack.c.l.b16 %v151
    %v351 = vunpack.c.l.b16 %v152
    %v352 = vunpack.c.l.b16 %v153
    %v353 = vunpack.c.l.b16 %v154
    %v354 = vunpack.c.l.b16 %v155
    %v355 = vunpack.c.l.b16 %v156
    %v356 = vunpack.c.l.b16 %v157
    %v357 = vunpack.c.l.b16 %v158
    %v358 = vunpack.c.l.b16 %v159
    %v359 = vunpack.c.l.b16 %v160
    %v360 = vunpack.c.l.b16 %v161
    %v361 = vunpack.c.l.b16 %v162
    %v362 = vunpack.c.l.b16 %v163
    %v363 = vunpack.c.l.b16 %v164
    %v364 = vunpack.c.l.b16 %v165
    %v365 = vunpack.c.l.b16 %v166
    %v366 = vunpack.c.l.b16 %v167
    %v367 = vunpack.c.l.b16 %v168
    %v368 = vunpack.c.l.b16 %v169
    %v369 = vunpack.c.l.b16 %v170
    %v370 = vunpack.c.l.b16 %v171
    %v371 = vunpack.c.l.b16 %v172
    %v372 = vunpack.c.l.b16 %v173
    %v373 = vunpack.c.l.b16 %v174
    %v374 = vunpack.c.l.b16 %v175
    %v375 = vunpack.c.l.b16 %v176
    %v376 = vunpack.c.l.b16 %v177
    %v377 = vunpack.c.l.b16 %v178
    %v378 = vunpack.c.l.b16 %v179
    %v379 = vunpack.c.l.b16 %v180
    %v380 = vunpack.c.l.b16 %v181
    %v381 = vunpack.c.l.b16 %v182
    %v382 = vunpack.c.l.b16 %v183
    %v383 = vunpack.c.l.b16 %v184
    %v384 = vunpack.c.l.b16 %v185
    %v385 = vunpack.c.l.b16 %v186
    %v386 = vunpack.c.l.b16 %v187
    %v387 = vunpack.c.l.b16 %v188
    %v388 = vunpack.c.l.b16 %v189
    %v389 = vunpack.c.l.b16 %v190
    %v390 = vpack.c.b16 %v295, %v294
    %v391 = vpack.c.b16 %v297, %v296
    %v392 = vpack.c.b16 %v299, %v298
    %v393 = vpack.c.b16 %v301, %v300
    %v394 = vpack.c.b16 %v303, %v302
    %v395 = vpack.c.b16 %v305, %v304
    %v396 = vpack.c.b16 %v307, %v306
    %v397 = vpack.c.b16 %v309, %v308
    %v398 = vpack.c.b16 %v311, %v310
    %v399 = vpack.c.b16 %v313, %v312
    %v400 = vpack.c.b16 %v315, %v314
    %v401 = vpack.c.b16 %v317, %v316
    %v402 = vpack.c.b16 %v319, %v318
    %v403 = vpack.c.b16 %v321, %v320
    %v404 = vpack.c.b16 %v323, %v322
    %v405 = vpack.c.b16 %v325, %v324
    %v406 = vpack.c.b16 %v327, %v326
    %v407 = vpack.c.b16 %v329, %v328
    %v408 = vpack.c.b16 %v331, %v330
    %v409 = vpack.c.b16 %v333, %v332
    %v410 = vpack.c.b16 %v335, %v334
    %v411 = vpack.c.b16 %v337, %v336
    %v412 = vpack.c.b16 %v339, %v338
    %v413 = vpack.c.b16 %v341, %v340
    %v414 = vpack.c.b16 %v343, %v342
    %v415 = vpack.c.b16 %v345, %v344
    %v416 = vpack.c.b16 %v347, %v346
    %v417 = vpack.c.b16 %v349, %v348
    %v418 = vpack.c.b16 %v351, %v350
    %v419 = vpack.c.b16 %v353, %v352
    %v420 = vpack.c.b16 %v355, %v354
    %v421 = vpack.c.b16 %v357, %v356
    %v422 = vpack.c.b16 %v359, %v358
    %v423 = vpack.c.b16 %v361, %v360
    %v424 = vpack.c.b16 %v363, %v362
    %v425 = vpack.c.b16 %v365, %v364
    %v426 = vpack.c.b16 %v367, %v366
    %v427 = vpack.c.b16 %v369, %v368
    %v428 = vpack.c.b16 %v371, %v370
    %v429 = vpack.c.b16 %v373, %v372
    %v430 = vpack.c.b16 %v375, %v374
    %v431 = vpack.c.b16 %v377, %v376
    %v432 = vpack.c.b16 %v379, %v378
    %v433 = vpack.c.b16 %v381, %v380
    %v434 = vpack.c.b16 %v383, %v382
    %v435 = vpack.c.b16 %v385, %v384
    %v436 = vpack.c.b16 %v387, %v386
    %v437 = vpack.c.b16 %v389, %v388
    %486 = vmatprep.subr.bf16.mxu0 0
    %487 = vmatpush1.bf16.msra.mxu0 %v397
    %488 = vmatprep.subr.bf16.mxu0 0
    %489 = vmatpush1.bf16.msra.mxu0 %v396
    %490 = vmatprep.subr.bf16.mxu0 0
    %491 = vmatpush1.bf16.msra.mxu0 %v395
    %492 = vmatprep.subr.bf16.mxu0 0
    %493 = vmatpush1.bf16.msra.mxu0 %v394
    %494 = vmatprep.subr.bf16.mxu0 0
    %495 = vmatpush1.bf16.msra.mxu0 %v393
    %496 = vmatprep.subr.bf16.mxu0 0
    %497 = vmatpush1.bf16.msra.mxu0 %v392
    %498 = vmatprep.subr.bf16.mxu0 0
    %499 = vmatpush1.bf16.msra.mxu0 %v391
    %500 = vmatprep.subr.bf16.mxu0 0
    %501 = vmatpush1.bf16.msra.mxu0 %v390
    %502 = vmatprep.subr.bf16.mxu0 0
    %503 = vmatpush2.bf16.msra.mxu0 %v405
    %504 = vmatprep.subr.bf16.mxu0 0
    %505 = vmatpush2.bf16.msra.mxu0 %v404
    %506 = vmatprep.subr.bf16.mxu0 0
    %507 = vmatpush2.bf16.msra.mxu0 %v403
    %508 = vmatprep.subr.bf16.mxu0 0
    %509 = vmatpush2.bf16.msra.mxu0 %v402
    %510 = vmatprep.subr.bf16.mxu0 0
    %511 = vmatpush2.bf16.msra.mxu0 %v401
    %512 = vmatprep.subr.bf16.mxu0 0
    %513 = vmatpush2.bf16.msra.mxu0 %v400
    %514 = vmatprep.subr.bf16.mxu0 0
    %515 = vmatpush2.bf16.msra.mxu0 %v399
    %516 = vmatprep.subr.bf16.mxu0 0
    %517 = vmatpush2.bf16.msra.mxu0 %v398
    %518 = vmatprep.mubr.bf16.mxu0 %v90
    %519 = vmatmul.mubr.bf16.gmra.mxu0 %v89
    %v520 = vpop.f32.mrf.mxu0
    %v521 = vadd.f32 %v196, %v520
    %v522 = vpop.f32.mrf.mxu0
    %v523 = vpop.f32.mrf.mxu0
    %v524 = vadd.f32 %v196, %v523
    %v525 = vpop.f32.mrf.mxu0
    %526 = vdwg.mxu0
    %527 = vmatprep.subr.bf16.mxu0 0
    %528 = vmatpush1.bf16.msra.mxu0 %v413
    %529 = vmatprep.subr.bf16.mxu0 0
    %530 = vmatpush1.bf16.msra.mxu0 %v412
    %531 = vmatprep.subr.bf16.mxu0 0
    %532 = vmatpush1.bf16.msra.mxu0 %v411
    %533 = vmatprep.subr.bf16.mxu0 0
    %534 = vmatpush1.bf16.msra.mxu0 %v410
    %535 = vmatprep.subr.bf16.mxu0 0
    %536 = vmatpush1.bf16.msra.mxu0 %v409
    %537 = vmatprep.subr.bf16.mxu0 0
    %538 = vmatpush1.bf16.msra.mxu0 %v408
    %539 = vmatprep.subr.bf16.mxu0 0
    %540 = vmatpush1.bf16.msra.mxu0 %v407
    %541 = vmatprep.subr.bf16.mxu0 0
    %542 = vmatpush1.bf16.msra.mxu0 %v406
    %543 = vmatprep.subr.bf16.mxu0 0
    %544 = vmatpush2.bf16.msra.mxu0 %v421
    %545 = vmatprep.subr.bf16.mxu0 0
    %546 = vmatpush2.bf16.msra.mxu0 %v420
    %547 = vmatprep.subr.bf16.mxu0 0
    %548 = vmatpush2.bf16.msra.mxu0 %v419
    %549 = vmatprep.subr.bf16.mxu0 0
    %550 = vmatpush2.bf16.msra.mxu0 %v418
    %551 = vmatprep.subr.bf16.mxu0 0
    %552 = vmatpush2.bf16.msra.mxu0 %v417
    %553 = vmatprep.subr.bf16.mxu0 0
    %554 = vmatpush2.bf16.msra.mxu0 %v416
    %555 = vmatprep.subr.bf16.mxu0 0
    %556 = vmatpush2.bf16.msra.mxu0 %v415
    %557 = vmatprep.subr.bf16.mxu0 0
    %558 = vmatpush2.bf16.msra.mxu0 %v414
    %559 = vmatprep.mubr.bf16.mxu0 %v92
    %560 = vmatmul.mubr.bf16.gmra.mxu0 %v91
    %v561 = vpop.f32.mrf.mxu0
    %v562 = vadd.f32 %v521, %v561
    %v563 = vpop.f32.mrf.mxu0
    %v564 = vpop.f32.mrf.mxu0
    %v565 = vadd.f32 %v524, %v564
    %v566 = vpop.f32.mrf.mxu0
    %567 = vdwg.mxu0
    %568 = vmatprep.subr.bf16.mxu0 0
    %569 = vmatpush1.bf16.msra.mxu0 %v429
    %570 = vmatprep.subr.bf16.mxu0 0
    %571 = vmatpush1.bf16.msra.mxu0 %v428
    %572 = vmatprep.subr.bf16.mxu0 0
    %573 = vmatpush1.bf16.msra.mxu0 %v427
    %574 = vmatprep.subr.bf16.mxu0 0
    %575 = vmatpush1.bf16.msra.mxu0 %v426
    %576 = vmatprep.subr.bf16.mxu0 0
    %577 = vmatpush1.bf16.msra.mxu0 %v425
    %578 = vmatprep.subr.bf16.mxu0 0
    %579 = vmatpush1.bf16.msra.mxu0 %v424
    %580 = vmatprep.subr.bf16.mxu0 0
    %581 = vmatpush1.bf16.msra.mxu0 %v423
    %582 = vmatprep.subr.bf16.mxu0 0
    %583 = vmatpush1.bf16.msra.mxu0 %v422
    %584 = vmatprep.subr.bf16.mxu0 0
    %585 = vmatpush2.bf16.msra.mxu0 %v437
    %586 = vmatprep.subr.bf16.mxu0 0
    %587 = vmatpush2.bf16.msra.mxu0 %v436
    %588 = vmatprep.subr.bf16.mxu0 0
    %589 = vmatpush2.bf16.msra.mxu0 %v435
    %590 = vmatprep.subr.bf16.mxu0 0
    %591 = vmatpush2.bf16.msra.mxu0 %v434
    %592 = vmatprep.subr.bf16.mxu0 0
    %593 = vmatpush2.bf16.msra.mxu0 %v433
    %594 = vmatprep.subr.bf16.mxu0 0
    %595 = vmatpush2.bf16.msra.mxu0 %v432
    %596 = vmatprep.subr.bf16.mxu0 0
    %597 = vmatpush2.bf16.msra.mxu0 %v431
    %598 = vmatprep.subr.bf16.mxu0 0
    %599 = vmatpush2.bf16.msra.mxu0 %v430
    %600 = vmatprep.mubr.bf16.mxu0 %v94
    %601 = vmatmul.mubr.bf16.gmra.mxu0 %v93
    %v602 = vpop.f32.mrf.mxu0
    %v603 = vadd.f32 %v562, %v602
    %v604 = vpop.f32.mrf.mxu0
    %v605 = vpop.f32.mrf.mxu0
    %v606 = vadd.f32 %v565, %v605
    %v607 = vpop.f32.mrf.mxu0
    %608 = vdwg.mxu0
    %vm609 = vcmask 130048
    %v610 = vsel %vm609, %v603, -inf
    %611 = vmax.xlane.f32.xlu0 %v610
    %v612 = vpop.xlane.xlu0 %611
    %v613 = vsel %vm609, %v606, -inf
    %614 = vmax.xlane.f32.xlu0 %v613
    %v615 = vpop.xlane.xlu0 %614
    %v616 = vsub.f32 %v603, %v612
    %v617 = vsub.f32 %v606, %v615
    %v618 = vmul.f32 %v616, 1.442695
    %v619 = vpow.pop %v618
    %v620 = vmul.f32 %v617, 1.442695
    %v621 = vpow.pop %v620
    %v622 = vsel %vm609, %v619, 0.0
    %623 = vadd.xlane.f32.xlu0 %v622
    %v624 = vpop.xlane.xlu0 %623
    %v625 = vsel %vm609, %v621, 0.0
    %626 = vadd.xlane.f32.xlu0 %v625
    %v627 = vpop.xlane.xlu0 %626
    %v628 = vrcp.pop %v624
    %v629 = vmul.f32 %v619, %v628
    %v630 = vrcp.pop %v627
    %v631 = vmul.f32 %v621, %v630
    %v632 = vpack.c.bf16 %v631, %v629
    %v633 = vld [vmem:[#allocation7] sm:$0xf]
    %v634 = vld [vmem:[#allocation7 + $0x4] sm:$0xf]
    %v637 = vunpack.c.l.b16 %v633
    %v638 = vunpack.c.l.b16 %v634
    %v639 = vpack.c.b16 %v638, %v637
    %v642 = vsel %vm609, %v632, 0
    %644 = vmatprep.subr.bf16.mxu0 0
    %645 = vmatpush1.bf16.msra.mxu0 0
    %646 = vmatprep.subr.bf16.mxu0 0
    %647 = vmatpush1.bf16.msra.mxu0 0
    %648 = vmatprep.subr.bf16.mxu0 0
    %649 = vmatpush1.bf16.msra.mxu0 0
    %650 = vmatprep.subr.bf16.mxu0 0
    %651 = vmatpush1.bf16.msra.mxu0 0
    %652 = vmatprep.subr.bf16.mxu0 0
    %653 = vmatpush1.bf16.msra.mxu0 0
    %654 = vmatprep.subr.bf16.mxu0 0
    %655 = vmatpush1.bf16.msra.mxu0 0
    %656 = vmatprep.subr.bf16.mxu0 0
    %657 = vmatpush1.bf16.msra.mxu0 0
    %658 = vmatprep.subr.bf16.mxu0 0
    %659 = vmatpush1.bf16.msra.mxu0 %v639
    %660 = vmatprep.subr.bf16.mxu0 0
    %661 = vmatpush2.bf16.msra.mxu0 0
    %662 = vmatprep.subr.bf16.mxu0 0
    %663 = vmatpush2.bf16.msra.mxu0 0
    %664 = vmatprep.subr.bf16.mxu0 0
    %665 = vmatpush2.bf16.msra.mxu0 0
    %666 = vmatprep.subr.bf16.mxu0 0
    %667 = vmatpush2.bf16.msra.mxu0 0
    %668 = vmatprep.subr.bf16.mxu0 0
    %669 = vmatpush2.bf16.msra.mxu0 0
    %670 = vmatprep.subr.bf16.mxu0 0
    %671 = vmatpush2.bf16.msra.mxu0 0
    %672 = vmatprep.subr.bf16.mxu0 0
    %673 = vmatpush2.bf16.msra.mxu0 0
    %674 = vmatprep.subr.bf16.mxu0 0
    %675 = vmatpush2.bf16.msra.mxu0 0
    %676 = vmatprep.mubr.bf16.mxu0 0
    %677 = vmatmul.mubr.bf16.gmra.mxu0 %v642
    %v678 = vpop.f32.mrf.mxu0
    %v679 = vadd.f32 0.0, %v678
    %v680 = vpop.f32.mrf.mxu0
    %v681 = vpop.f32.mrf.mxu0
    %v682 = vadd.f32 0.0, %v681
    %v683 = vpop.f32.mrf.mxu0
    %684 = vdwg.mxu0
    %v685 = vmul.f32 %v679, %v603
    %v686 = vmul.f32 %v682, %v606
    %v687 = vpack.c.bf16 %v686, %v685
    %v688 = vld [vmem:[#allocation8] sm:$0xf]
    %v689 = vld [vmem:[#allocation8 + $0x4] sm:$0xf]
    %v690 = vld [vmem:[#allocation8 + $0x8] sm:$0xf]
    %v691 = vld [vmem:[#allocation8 + $0xc] sm:$0xf]
    %v692 = vld [vmem:[#allocation8 + $0x10] sm:$0xf]
    %v693 = vld [vmem:[#allocation8 + $0x14] sm:$0xf]
    %v694 = vld [vmem:[#allocation8 + $0x18] sm:$0xf]
    %v695 = vld [vmem:[#allocation8 + $0x1c] sm:$0xf]
    %v696 = vld [vmem:[#allocation8 + $0x20] sm:$0xf]
    %v697 = vld [vmem:[#allocation8 + $0x24] sm:$0xf]
    %v698 = vld [vmem:[#allocation8 + $0x28] sm:$0xf]
    %v699 = vld [vmem:[#allocation8 + $0x2c] sm:$0xf]
    %v700 = vld [vmem:[#allocation8 + $0x30] sm:$0xf]
    %v701 = vld [vmem:[#allocation8 + $0x34] sm:$0xf]
    %v702 = vld [vmem:[#allocation8 + $0x38] sm:$0xf]
    %v703 = vld [vmem:[#allocation8 + $0x3c] sm:$0xf]
    %v720 = vunpack.c.l.b16 %v688
    %v721 = vunpack.c.l.b16 %v689
    %v722 = vunpack.c.l.b16 %v690
    %v723 = vunpack.c.l.b16 %v691
    %v724 = vunpack.c.l.b16 %v692
    %v725 = vunpack.c.l.b16 %v693
    %v726 = vunpack.c.l.b16 %v694
    %v727 = vunpack.c.l.b16 %v695
    %v728 = vunpack.c.l.b16 %v696
    %v729 = vunpack.c.l.b16 %v697
    %v730 = vunpack.c.l.b16 %v698
    %v731 = vunpack.c.l.b16 %v699
    %v732 = vunpack.c.l.b16 %v700
    %v733 = vunpack.c.l.b16 %v701
    %v734 = vunpack.c.l.b16 %v702
    %v735 = vunpack.c.l.b16 %v703
    %v736 = vpack.c.b16 %v721, %v720
    %v737 = vpack.c.b16 %v723, %v722
    %v738 = vpack.c.b16 %v725, %v724
    %v739 = vpack.c.b16 %v727, %v726
    %v740 = vpack.c.b16 %v729, %v728
    %v741 = vpack.c.b16 %v731, %v730
    %v742 = vpack.c.b16 %v733, %v732
    %v743 = vpack.c.b16 %v735, %v734
    %752 = vmatprep.subr.bf16.mxu0 0
    %753 = vmatpush1.bf16.msra.mxu0 %v743
    %754 = vmatprep.subr.bf16.mxu0 0
    %755 = vmatpush1.bf16.msra.mxu0 %v742
    %756 = vmatprep.subr.bf16.mxu0 0
    %757 = vmatpush1.bf16.msra.mxu0 %v741
    %758 = vmatprep.subr.bf16.mxu0 0
    %759 = vmatpush1.bf16.msra.mxu0 %v740
    %760 = vmatprep.subr.bf16.mxu0 0
    %761 = vmatpush1.bf16.msra.mxu0 %v739
    %762 = vmatprep.subr.bf16.mxu0 0
    %763 = vmatpush1.bf16.msra.mxu0 %v738
    %764 = vmatprep.subr.bf16.mxu0 0
    %765 = vmatpush1.bf16.msra.mxu0 %v737
    %766 = vmatprep.subr.bf16.mxu0 0
    %767 = vmatpush1.bf16.msra.mxu0 %v736
    %768 = vmatprep.subr.bf16.mxu0 0
    %769 = vmatpush2.bf16.msra.mxu0 0
    %770 = vmatprep.subr.bf16.mxu0 0
    %771 = vmatpush2.bf16.msra.mxu0 0
    %772 = vmatprep.subr.bf16.mxu0 0
    %773 = vmatpush2.bf16.msra.mxu0 0
    %774 = vmatprep.subr.bf16.mxu0 0
    %775 = vmatpush2.bf16.msra.mxu0 0
    %776 = vmatprep.subr.bf16.mxu0 0
    %777 = vmatpush2.bf16.msra.mxu0 0
    %778 = vmatprep.subr.bf16.mxu0 0
    %779 = vmatpush2.bf16.msra.mxu0 0
    %780 = vmatprep.subr.bf16.mxu0 0
    %781 = vmatpush2.bf16.msra.mxu0 0
    %782 = vmatprep.subr.bf16.mxu0 0
    %783 = vmatpush2.bf16.msra.mxu0 0
    %784 = vmatprep.mubr.bf16.mxu0 0
    %785 = vmatmul.mubr.bf16.gmra.mxu0 %v687
    %v786 = vpop.f32.mrf.mxu0
    %v787 = vadd.f32 0.0, %v786
    %v788 = vpop.f32.mrf.mxu0
    %v789 = vpop.f32.mrf.mxu0
    %v790 = vadd.f32 0.0, %v789
    %v791 = vpop.f32.mrf.mxu0
    %792 = vdwg.mxu0
    %793 = vst [vmem:[#allocation10] sm:$0xff] %v787
    %794 = vst [vmem:[#allocation10 + $0x8] sm:$0xff] %v790
    // Predicated region
    $region38: #{tpu_custom_call.1} parent=1 // pred_check
      _
    $region39: #{tpu_custom_call.1} parent=1 // pred_check_branch
      %796 = sbr.rel (0) target = $region41
    $region40: #{tpu_custom_call.1} parent=1 // pred_region
      %s798 = ssub.s32 256, 256
      %799 = vsyncadd [#allocation4], %s798
      %s800 = sshll.u32 [#allocation10], 4
      %s801 = int_to_ptr.vmem [resolvable:$true] %s800
      %806 = dma.vmem_to_hbm [thread:$0]  %s801, 256, %s5, [#allocation4], 128, 128, 8
    $region41: #{tpu_custom_call.1} parent=1 // pred_fallthru
      _
    // Predicated region
    $region42: #{tpu_custom_call.1} parent=1 // pred_check
      _
    $region43: #{tpu_custom_call.1} parent=1 // pred_check_branch
      %808 = sbr.rel (0) target = $region45
    $region44: #{tpu_custom_call.1} parent=1 // pred_region
      %809 = dma.done [#allocation4], 256
    $region45: #{tpu_custom_call.1} parent=1 // pred_fallthru
      _
    %810 = vsyncpa [#allocation3], 1
    %811 = vsyncpa [#allocation6], 1
    %812 = vsyncpa [#allocation9], 1
    %813 = vsyncpa [#allocation4], 1

</llo_original>
